<compile_context>
chip_gen: v5e
topology: v5e:2x2
jax: 0.10.0
libtpu: 0.0.40
codegen_flags: <defaults>
</compile_context>

<pallas_src>
import jax
import jax.numpy as jnp
from jax import lax
from jax.experimental import pallas as pl
from jax.experimental.pallas import tpu as pltpu


def _make_kernel(B, TB, half, use_slices):
    def kernel(s_ref, t_ref, o_ref):
        i = pl.program_id(0)
        s = s_ref[...].astype(jnp.float32)   # (TB, C)
        t = t_ref[...].astype(jnp.float32)   # (TB, C)

        def log_partial(x, take_low):
            # log( sum_{subset} softmax(x, axis=1) ), numerically stable.
            m = jnp.max(x, axis=1, keepdims=True)
            e = jnp.exp(x - m)                                       # (TB, C)
            if use_slices:
                # lane-aligned static slices: no iota/compare/select, and the
                # denominator reuses the two half sums.
                lo = jnp.sum(e[:, :half], axis=1, keepdims=True)
                hi = jnp.sum(e[:, half:], axis=1, keepdims=True)
                num = lo if take_low else hi
                denom = lo + hi
            else:
                lane = lax.broadcasted_iota(jnp.int32, e.shape, 1)
                mask = (lane < half) if take_low else (lane >= half)
                num = jnp.sum(jnp.where(mask, e, 0.0), axis=1, keepdims=True)
                denom = jnp.sum(e, axis=1, keepdims=True)
            # log(num) - log(denom): avoids the divide before the log.
            return jnp.log(num) - jnp.log(denom)                     # (TB, 1)

        term = log_partial(s, True) + log_partial(t, False)          # (TB, 1)

        # Mask out padded rows of a ragged last batch tile.
        row = lax.broadcasted_iota(jnp.int32, term.shape, 0) + i * TB
        term = jnp.where(row < B, term, 0.0)

        # One scalar partial per grid step (final mean/negate done in wrapper).
        o_ref[...] = jnp.reshape(jnp.sum(term), (1, 1))

    return kernel


def _choose_tile_b(B, C):
    # Keep one f32 (TB, C) intermediate tile under ~4 MiB so the double-
    # buffered inputs plus promoted temporaries stay well under v7x's 64 MiB
    # VMEM (and far under v5e/v6e's 128 MiB).
    max_tb = ((4 * 1024 * 1024) // (4 * C)) // 8 * 8
    max_tb = max(8, min(max_tb, 1024))
    if B <= max_tb:
        return B               # single (or full-dim) tile; always a legal block
    return max_tb


def my_criterion(outputs_st_s, outputs_st_t, *, tile_b=None):
    """Pallas TPU implementation of My_criterion.forward. Returns a scalar f32."""
    assert outputs_st_s.shape == outputs_st_t.shape
    assert outputs_st_s.ndim == 2, "expected (B, C) logits"
    B, C = outputs_st_s.shape
    half = C // 2
    use_slices = (half % 128 == 0) and (half > 0)

    TB = tile_b if tile_b is not None else _choose_tile_b(B, C)
    num_tiles = pl.cdiv(B, TB)

    itemsize = jnp.dtype(outputs_st_s.dtype).itemsize
    io_bytes = 2 * 2 * TB * C * itemsize          # 2 inputs x 2 pipeline buffers
    f32_tile = TB * C * 4                          # promoted / exp intermediates
    vmem_limit = int(min(max(io_bytes + 6 * f32_tile + (2 << 20), 32 << 20),
                         64 << 20))

    partials = pl.pallas_call(
        _make_kernel(B, TB, half, use_slices),
        out_shape=jax.ShapeDtypeStruct((num_tiles, 1), jnp.float32),
        grid_spec=pltpu.PrefetchScalarGridSpec(
            num_scalar_prefetch=0,
            grid=(num_tiles,),
            in_specs=[
                pl.BlockSpec((TB, C), lambda i: (i, 0)),
                pl.BlockSpec((TB, C), lambda i: (i, 0)),
            ],
            out_specs=pl.BlockSpec((1, 1), lambda i: (i, 0)),
        ),
        compiler_params=pltpu.CompilerParams(
            dimension_semantics=("parallel",),
            vmem_limit_bytes=vmem_limit,
        ),
    )(outputs_st_s, outputs_st_t)

    # Tiny finalize in the wrapper: divide by the TRUE batch size and negate.
    return -(jnp.sum(partials) / B)


def _reference(outputs_st_s, outputs_st_t):
    # pure-JAX reference matching the PyTorch module, for a sanity check
    p_s = jax.nn.softmax(outputs_st_s.astype(jnp.float32), axis=1)
    p_t = jax.nn.softmax(outputs_st_t.astype(jnp.float32), axis=1)
    half = p_s.shape[1] // 2
    return (-jnp.mean(jnp.log(p_s[:, :half].sum(1)))
            - jnp.mean(jnp.log(p_t[:, half:].sum(1))))


if __name__ == "__main__":
    key = jax.random.PRNGKey(0)

    # Test 1: small shapes as implied by the module (mask path, single tile).
    k1, k2, k3, k4, k5, k6 = jax.random.split(key, 6)
    B, C = 8, 32
    s1 = jax.random.normal(k1, (B, C), dtype=jnp.float32)
    t1 = jax.random.normal(k2, (B, C), dtype=jnp.float32)
    loss1 = my_criterion(s1, t1)
    jax.block_until_ready(loss1)
    assert jnp.allclose(loss1, _reference(s1, t1), atol=1e-5, rtol=1e-5), loss1

    # Test 2: multi-tile + ragged last tile (forced small TB) on the mask path.
    B2, C2 = 20, 32
    s2 = jax.random.normal(k3, (B2, C2), dtype=jnp.float32)
    t2 = jax.random.normal(k4, (B2, C2), dtype=jnp.float32)
    loss2 = my_criterion(s2, t2, tile_b=8)
    jax.block_until_ready(loss2)
    assert jnp.allclose(loss2, _reference(s2, t2), atol=1e-5, rtol=1e-5), loss2

    # Test 3: lane-aligned slice path (half % 128 == 0).
    B3, C3 = 16, 256
    s3 = jax.random.normal(k5, (B3, C3), dtype=jnp.float32)
    t3 = jax.random.normal(k6, (B3, C3), dtype=jnp.float32)
    loss3 = my_criterion(s3, t3)
    jax.block_until_ready(loss3)
    assert jnp.allclose(loss3, _reference(s3, t3), atol=1e-5, rtol=1e-5), loss3

    print("KERNEL_OK")
</pallas_src>

<mosaic_0001>
module attributes {stable_mosaic.version = 11 : i64} {
  func.func @kernel(%arg0: i32, %arg1: memref<8x32xf32, #tpu.memory_space<vmem>>, %arg2: memref<8x32xf32, #tpu.memory_space<vmem>>, %arg3: memref<1x1xf32, #tpu.memory_space<vmem>>) attributes {dimension_semantics = [#tpu.dimension_semantics<parallel>], iteration_bounds = array<i64: 1>, scalar_prefetch = 0 : i64, scratch_operands = 0 : i64, tpu.core_type = #tpu.core_type<tc>, window_params = [{transform_indices = @transform_0, window_bounds = array<i64: 8, 32>}, {transform_indices = @transform_1, window_bounds = array<i64: 8, 32>}, {transform_indices = @transform_2, window_bounds = array<i64: 1, 1>}]} {
    %c0 = arith.constant 0 : index
    %c0_0 = arith.constant 0 : index
    %0 = vector.load %arg1[%c0, %c0_0] : memref<8x32xf32, #tpu.memory_space<vmem>>, vector<8x32xf32>
    %c0_1 = arith.constant 0 : index
    %c0_2 = arith.constant 0 : index
    %1 = vector.load %arg2[%c0_1, %c0_2] : memref<8x32xf32, #tpu.memory_space<vmem>>, vector<8x32xf32>
    %cst = arith.constant dense<0xFF800000> : vector<8xf32>
    %2 = vector.multi_reduction <maximumf>, %0, %cst [1] : vector<8x32xf32> to vector<8xf32>
    %3 = vector.shape_cast %2 : vector<8xf32> to vector<8x1xf32>
    %4 = vector.broadcast %3 : vector<8x1xf32> to vector<8x32xf32>
    %5 = arith.subf %0, %4 : vector<8x32xf32>
    %6 = math.exp %5 : vector<8x32xf32>
    %7 = tpu.iota {dimensions = array<i32: 1>} : vector<8x32xi32>
    %c16_i32 = arith.constant 16 : i32
    %8 = vector.broadcast %c16_i32 : i32 to vector<8x32xi32>
    %9 = arith.cmpi slt, %7, %8 : vector<8x32xi32>
    %cst_3 = arith.constant 0.000000e+00 : f32
    %10 = vector.broadcast %cst_3 : f32 to vector<8x32xf32>
    %11 = arith.select %9, %6, %10 : vector<8x32xi1>, vector<8x32xf32>
    %cst_4 = arith.constant dense<0.000000e+00> : vector<8xf32>
    %12 = vector.multi_reduction <add>, %11, %cst_4 [1] : vector<8x32xf32> to vector<8xf32>
    %13 = vector.shape_cast %12 : vector<8xf32> to vector<8x1xf32>
    %cst_5 = arith.constant dense<0.000000e+00> : vector<8xf32>
    %14 = vector.multi_reduction <add>, %6, %cst_5 [1] : vector<8x32xf32> to vector<8xf32>
    %15 = vector.shape_cast %14 : vector<8xf32> to vector<8x1xf32>
    %16 = math.log %13 : vector<8x1xf32>
    %17 = math.log %15 : vector<8x1xf32>
    %18 = arith.subf %16, %17 : vector<8x1xf32>
    %cst_6 = arith.constant dense<0xFF800000> : vector<8xf32>
    %19 = vector.multi_reduction <maximumf>, %1, %cst_6 [1] : vector<8x32xf32> to vector<8xf32>
    %20 = vector.shape_cast %19 : vector<8xf32> to vector<8x1xf32>
    %21 = vector.broadcast %20 : vector<8x1xf32> to vector<8x32xf32>
    %22 = arith.subf %1, %21 : vector<8x32xf32>
    %23 = math.exp %22 : vector<8x32xf32>
    %24 = tpu.iota {dimensions = array<i32: 1>} : vector<8x32xi32>
    %c16_i32_7 = arith.constant 16 : i32
    %25 = vector.broadcast %c16_i32_7 : i32 to vector<8x32xi32>
    %26 = arith.cmpi sge, %24, %25 : vector<8x32xi32>
    %cst_8 = arith.constant 0.000000e+00 : f32
    %27 = vector.broadcast %cst_8 : f32 to vector<8x32xf32>
    %28 = arith.select %26, %23, %27 : vector<8x32xi1>, vector<8x32xf32>
    %cst_9 = arith.constant dense<0.000000e+00> : vector<8xf32>
    %29 = vector.multi_reduction <add>, %28, %cst_9 [1] : vector<8x32xf32> to vector<8xf32>
    %30 = vector.shape_cast %29 : vector<8xf32> to vector<8x1xf32>
    %cst_10 = arith.constant dense<0.000000e+00> : vector<8xf32>
    %31 = vector.multi_reduction <add>, %23, %cst_10 [1] : vector<8x32xf32> to vector<8xf32>
    %32 = vector.shape_cast %31 : vector<8xf32> to vector<8x1xf32>
    %33 = math.log %30 : vector<8x1xf32>
    %34 = math.log %32 : vector<8x1xf32>
    %35 = arith.subf %33, %34 : vector<8x1xf32>
    %36 = arith.addf %18, %35 : vector<8x1xf32>
    %37 = tpu.iota {dimensions = array<i32: 0>} : vector<8x1xi32>
    %c8_i32 = arith.constant 8 : i32
    %38 = arith.muli %arg0, %c8_i32 : i32
    %39 = vector.broadcast %38 : i32 to vector<8x1xi32>
    %40 = arith.addi %37, %39 : vector<8x1xi32>
    %c8_i32_11 = arith.constant 8 : i32
    %41 = vector.broadcast %c8_i32_11 : i32 to vector<8x1xi32>
    %42 = arith.cmpi slt, %40, %41 : vector<8x1xi32>
    %cst_12 = arith.constant 0.000000e+00 : f32
    %43 = vector.broadcast %cst_12 : f32 to vector<8x1xf32>
    %44 = arith.select %42, %36, %43 : vector<8x1xi1>, vector<8x1xf32>
    %45 = vector.shape_cast %44 : vector<8x1xf32> to vector<1x8x1xf32>
    %cst_13 = arith.constant dense<0.000000e+00> : vector<1xf32>
    %46 = vector.multi_reduction <add>, %45, %cst_13 [1, 2] : vector<1x8x1xf32> to vector<1xf32>
    %47 = vector.shape_cast %46 : vector<1xf32> to vector<1x1x1xf32>
    %48 = vector.extract %47[0, 0, 0] : f32 from vector<1x1x1xf32>
    %49 = vector.broadcast %48 : f32 to vector<1x1xf32>
    %c0_14 = arith.constant 0 : index
    %c0_15 = arith.constant 0 : index
    %50 = vector.load %arg3[%c0_14, %c0_15] : memref<1x1xf32, #tpu.memory_space<vmem>>, vector<1x1xf32>
    tpu.vector_store %arg3[%c0_14, %c0_15], %49 {strides = array<i32>} : memref<1x1xf32, #tpu.memory_space<vmem>>, vector<1x1xf32>,
    return
  }
  func.func @transform_0(%arg0: i32) -> (i32, i32) {
    %c0_i32 = arith.constant 0 : i32
    %c0_i32_0 = arith.constant 0 : i32
    return %arg0, %c0_i32 : i32, i32
  }
  func.func @transform_1(%arg0: i32) -> (i32, i32) {
    %c0_i32 = arith.constant 0 : i32
    %c0_i32_0 = arith.constant 0 : i32
    return %arg0, %c0_i32 : i32, i32
  }
  func.func @transform_2(%arg0: i32) -> (i32, i32) {
    %c0_i32 = arith.constant 0 : i32
    %c0_i32_0 = arith.constant 0 : i32
    return %arg0, %c0_i32 : i32, i32
  }
}

</mosaic_0001>

<llo_original>
// kernel: tpu_custom_call.1
$region0: #{tpu_custom_call.1}
  #allocation0 [shape = 'u32[]', space=smem, size = 0x4, offset = 0x4, fixed_abs, tag = 'smem constant byte address 0x4 - core index']
  #allocation1 [shape = 'u32[72,128]{1,0:T(1,128)}', space=vmem, size = 0x9000, scoped, tag = 'internal scratch']
  %s0 = inlined_call_operand.hbm [shape: f32[8,32], index: 0, kind: input, shape index: {}]
  %s1 = inlined_call_operand.hbm [shape: f32[8,32], index: 1, kind: input, shape index: {}]
  %s2 = inlined_call_operand.hbm [shape: f32[1,1], index: 2, kind: output, shape index: {}]
  %s3 = sld [smem:[#allocation0]]
  $region26: #{tpu_custom_call.1} parent=0
    _
  %s5 = ssub.s32 1, %s3
  %s6 = scalar_select 0, %s5, %s3
  $region1: #{tpu_custom_call.1} parent=0
    #allocation2 [shape = 'u8[4096]{0}', space=vmem, size = 0x1000, scoped, tag = 'input window, operand 0, single buffered']
    #allocation3 [shape = 's32[1]{0}', space=sflag, size = 0x4, scoped, tag = 'scoped memory for tpu_custom_call.1']
    #allocation4 [shape = 's32[1]{0}', space=sflag, size = 0x4, scoped, tag = 'scoped memory for tpu_custom_call.1']
    #allocation5 [shape = 'u8[4096]{0}', space=vmem, size = 0x1000, scoped, tag = 'input window, operand 1, single buffered']
    #allocation6 [shape = 's32[1]{0}', space=sflag, size = 0x4, scoped, tag = 'scoped memory for tpu_custom_call.1']
    #allocation7 [shape = 'u8[512]{0}', space=vmem, size = 0x400, scoped, tag = 'output window, operand 0, single buffered']
    %7 = vsyncpa [#allocation3], 0
    %8 = vsyncpa [#allocation6], 0
    %9 = vsyncpa [#allocation4], 0
    // Predicated region
    $region2: #{tpu_custom_call.1} parent=1 // pred_check
      _
    $region3: #{tpu_custom_call.1} parent=1 // pred_check_branch
      %11 = sbr.rel (0) target = $region5
    $region4: #{tpu_custom_call.1} parent=1 // pred_region
      %13 = vsyncadd [#allocation3], 0
      %s15 = sshll.u32 %s0, 4
      %s16 = int_to_ptr.hbm [resolvable:$true] %s15
      %s17 = sshll.u32 [#allocation2], 4
      %s18 = int_to_ptr.vmem [resolvable:$true] %s17
      %20 = dma.hbm_to_vmem [thread:$0]  %s16, 128, %s18, [#allocation3]
    $region5: #{tpu_custom_call.1} parent=1 // pred_fallthru
      _
    // Predicated region
    $region6: #{tpu_custom_call.1} parent=1 // pred_check
      _
    $region7: #{tpu_custom_call.1} parent=1 // pred_check_branch
      %22 = sbr.rel (0) target = $region9
    $region8: #{tpu_custom_call.1} parent=1 // pred_region
      %24 = vsyncadd [#allocation6], 0
      %s26 = sshll.u32 %s1, 4
      %s27 = int_to_ptr.hbm [resolvable:$true] %s26
      %s28 = sshll.u32 [#allocation5], 4
      %s29 = int_to_ptr.vmem [resolvable:$true] %s28
      %31 = dma.hbm_to_vmem [thread:$0]  %s27, 128, %s29, [#allocation6]
    $region9: #{tpu_custom_call.1} parent=1 // pred_fallthru
      _
    // Predicated region
    $region10: #{tpu_custom_call.1} parent=1 // pred_check
      _
    $region11: #{tpu_custom_call.1} parent=1 // pred_check_branch
      %33 = sbr.rel (0) target = $region13
    $region12: #{tpu_custom_call.1} parent=1 // pred_region
      %35 = dma.done [#allocation3], 128
    $region13: #{tpu_custom_call.1} parent=1 // pred_fallthru
      _
    // Predicated region
    $region14: #{tpu_custom_call.1} parent=1 // pred_check
      _
    $region15: #{tpu_custom_call.1} parent=1 // pred_check_branch
      %37 = sbr.rel (0) target = $region17
    $region16: #{tpu_custom_call.1} parent=1 // pred_region
      %39 = dma.done [#allocation6], 128
    $region17: #{tpu_custom_call.1} parent=1 // pred_fallthru
      _
    %v40 = vld [vmem:[#allocation2] sm:$0xff]
    %v41 = vld [vmem:[#allocation5] sm:$0xff]
    %vm42 = vcmask 261120
    %v43 = vsel %vm42, %v40, -inf
    %44 = vmax.xlane.f32.xlu0 %v43
    %v45 = vpop.xlane.xlu0 %44
    %v46 = vsub.f32 %v40, %v45
    %v47 = vmul.f32 %v46, 1.442695
    %v48 = vpow.pop %v47
    %v49 = vlaneseq
    %v50 = vand.u32 %v49, 127
    %vm51 = vcmp.lt.s32.totalorder %v50, 16
    %v52 = vsel %vm51, %v48, 0.0
    %v53 = vsel %vm42, %v52, 0.0
    %54 = vadd.xlane.f32.xlu0 %v53
    %v55 = vpop.xlane.xlu0 %54
    %v56 = vsel %vm42, %v48, 0.0
    %57 = vadd.xlane.f32.xlu0 %v56
    %v58 = vpop.xlane.xlu0 %57
    %v59 = vlog2.pop %v55
    %v60 = vmul.f32 %v59, 0.6931472
    %v61 = vlog2.pop %v58
    %v62 = vmul.f32 %v61, 0.6931472
    %v63 = vsub.f32 %v60, %v62
    %v64 = vsel %vm42, %v41, -inf
    %65 = vmax.xlane.f32.xlu0 %v64
    %v66 = vpop.xlane.xlu0 %65
    %v67 = vsub.f32 %v41, %v66
    %v68 = vmul.f32 %v67, 1.442695
    %v69 = vpow.pop %v68
    %vm70 = vcmp.ge.s32.totalorder %v50, 16
    %v71 = vsel %vm70, %v69, 0.0
    %v72 = vsel %vm42, %v71, 0.0
    %73 = vadd.xlane.f32.xlu0 %v72
    %v74 = vpop.xlane.xlu0 %73
    %v75 = vsel %vm42, %v69, 0.0
    %76 = vadd.xlane.f32.xlu0 %v75
    %v77 = vpop.xlane.xlu0 %76
    %v78 = vlog2.pop %v74
    %v79 = vmul.f32 %v78, 0.6931472
    %v80 = vlog2.pop %v77
    %v81 = vmul.f32 %v80, 0.6931472
    %v82 = vsub.f32 %v79, %v81
    %v83 = vadd.f32 %v63, %v82
    %v84 = vlaneseq
    %v85 = vshrl.u32 %v84, 7
    %s86 = smul.u32 0, 8
    %v87 = vstv %s86
    %v88 = vadd.s32 %v85, %v87
    %vm89 = vcmp.lt.s32.totalorder %v88, 8
    %v90 = vsel %vm89, %v83, 0.0
    %vm91 = vcmask 7168
    %v92 = vsel %vm91, %v90, 0.0
    %93 = vadd.xlane.f32.xlu0 %v92
    %v94 = vpop.xlane.xlu0 %93
    %v95 = vrot.slane %v94, 4
    %v96 = vadd.f32 %v94, %v95
    %v97 = vrot.slane %v96, 2
    %v98 = vadd.f32 %v96, %v97
    %v99 = vrot.slane %v98, 1
    %v100 = vadd.f32 %v98, %v99
    %s101 = vtos %v100
    %v102 = vstv %s101
    %vm103 = vcmask 0
    %104 = vst.msk [vmem:[#allocation7] sm:$0x1] %vm103, %v102
    // Predicated region
    $region18: #{tpu_custom_call.1} parent=1 // pred_check
      _
    $region19: #{tpu_custom_call.1} parent=1 // pred_check_branch
      %106 = sbr.rel (0) target = $region21
    $region20: #{tpu_custom_call.1} parent=1 // pred_region
      %108 = vsyncadd [#allocation4], 0
      %s110 = sshll.u32 [#allocation7], 4
      %s111 = int_to_ptr.vmem [resolvable:$true] %s110
      %s112 = sshll.u32 %s2, 4
      %s113 = int_to_ptr.hbm [resolvable:$true] %s112
      %115 = dma.vmem_to_hbm [thread:$0]  %s111, 16, %s113, [#allocation4]
    $region21: #{tpu_custom_call.1} parent=1 // pred_fallthru
      _
    // Predicated region
    $region22: #{tpu_custom_call.1} parent=1 // pred_check
      _
    $region23: #{tpu_custom_call.1} parent=1 // pred_check_branch
      %117 = sbr.rel (0) target = $region25
    $region24: #{tpu_custom_call.1} parent=1 // pred_region
      %119 = dma.done [#allocation4], 16
    $region25: #{tpu_custom_call.1} parent=1 // pred_fallthru
      _
    %120 = vsyncpa [#allocation3], 1
    %121 = vsyncpa [#allocation6], 1
    %122 = vsyncpa [#allocation4], 1

</llo_original>
